<compile_context>
chip_gen: v6e
topology: v6e:2x2x1
jax: 0.10.0
libtpu: 0.0.40
codegen_flags: <defaults>
</compile_context>

<pallas_src>
import functools

import jax
import jax.numpy as jnp
from jax.experimental import pallas as pl
from jax.experimental.pallas import tpu as pltpu

LANES = 128
MAX_BLOCK_ROWS = 4096   # (4096,128) f32 block = 2 MiB; 2 inputs x 2 bufs = 8 MiB
MAX_OUTER = 2           # up to 2 TensorCores/chip (v7x); harmless on v5e/v6e

# Deterministic "parameters" of MixLoss (the *args of __init__): losses + weights.
W_L1 = 0.4
W_MSE = 0.6


def _mix_loss_kernel(x_ref, y_ref, partial_ref, *,
                     block_rows, valid_rows, w_l1, w_mse, mask_rows):
    o = pl.program_id(0)
    i = pl.program_id(1)
    n_inner = pl.num_programs(1)

    # Output tile (1,1,LANES) is resident across the inner ("arbitrary")
    # reduction axis -> init once, accumulate, single HBM writeback at the end.
    @pl.when(i == 0)
    def _init():
        partial_ref[...] = jnp.zeros_like(partial_ref)

    # Cast only inside the kernel (bf16/fp16 inputs stay narrow in HBM).
    x = x_ref[...].astype(jnp.float32)
    y = y_ref[...].astype(jnp.float32)
    d = jnp.abs(x - y)
    # w1*|d| + w2*d^2 == |d| * (w1 + w2*|d|)  (one abs, two mul, one add).
    contrib = d * (w_l1 + w_mse * d)

    if mask_rows:
        # Only compiled in when the flat size doesn't tile evenly: rows beyond
        # `valid_rows` belong to a ragged trailing block (unspecified padding)
        # or to a clamped duplicate block -> select them to zero (NaN-safe).
        blk = o * n_inner + i
        row = blk * block_rows + jax.lax.broadcasted_iota(
            jnp.int32, (block_rows, LANES), 0)
        contrib = jnp.where(row < valid_rows, contrib, 0.0)

    # Per-lane partial sums: one sublane reduce + one VPU add per block.
    partial_ref[0] += jnp.sum(contrib, axis=0, keepdims=True)


def mix_loss(x, y, w_l1=W_L1, w_mse=W_MSE):
    assert x.shape == y.shape
    n = x.size

    xf = x.reshape(-1)
    yf = y.reshape(-1)

    # Only requirement for the lane-dense reshape: flat length must be a
    # multiple of one (sublane, lane) tile for the input dtype. Common sizes
    # take the copy-free path (no pad, no dtype promotion in the wrapper).
    itemsize = jnp.dtype(x.dtype).itemsize
    row_align = {4: 8, 2: 16, 1: 32}.get(itemsize, 8)
    align = row_align * LANES
    rem = n % align
    if rem:
        # TODO(synk): ragged total sizes still pay one small pad copy; aligned
        # sizes (the common case) avoid any extra HBM pass. Zero-pad -> d == 0
        # contributes nothing, so no extra masking is required for these rows.
        xf = jnp.pad(xf, (0, align - rem))
        yf = jnp.pad(yf, (0, align - rem))

    x2d = xf.reshape(-1, LANES)
    y2d = yf.reshape(-1, LANES)
    m = x2d.shape[0]                                   # multiple of row_align

    block_rows = min(MAX_BLOCK_ROWS, m)                # multiple of row_align
    n_blocks = (m + block_rows - 1) // block_rows
    n_outer = min(MAX_OUTER, n_blocks)
    n_inner = (n_blocks + n_outer - 1) // n_outer

    # Static decision: mask only if the last block is ragged (garbage rows) or
    # the grid revisits the last block (clamped duplicate).
    mask_rows = (n_blocks * block_rows != m) or (n_outer * n_inner != n_blocks)

    def in_map(o, i):
        # Clamp so the trailing extra block (when n_blocks % n_outer != 0)
        # never issues a fully out-of-bounds DMA; the kernel masks it to zero.
        return (jnp.minimum(o * n_inner + i, n_blocks - 1), 0)

    kernel = functools.partial(
        _mix_loss_kernel,
        block_rows=block_rows,
        valid_rows=m,
        w_l1=float(w_l1),
        w_mse=float(w_mse),
        mask_rows=mask_rows,
    )

    partials = pl.pallas_call(
        kernel,
        out_shape=jax.ShapeDtypeStruct((n_outer, 1, LANES), jnp.float32),
        grid_spec=pltpu.PrefetchScalarGridSpec(
            num_scalar_prefetch=0,
            grid=(n_outer, n_inner),
            in_specs=[
                pl.BlockSpec((block_rows, LANES), in_map),
                pl.BlockSpec((block_rows, LANES), in_map),
            ],
            out_specs=pl.BlockSpec((1, 1, LANES), lambda o, i: (o, 0, 0)),
        ),
        compiler_params=pltpu.CompilerParams(
            # outer: independent partial sums (megacore on v7x);
            # inner: sequential reduction into the resident output tile.
            dimension_semantics=("parallel", "arbitrary"),
        ),
    )(x2d, y2d)

    # Tiny final combine (n_outer * 128 f32 values) in plain JAX.
    return jnp.sum(partials) * (1.0 / float(n))


def mix_loss_ref(x, y, w_l1=W_L1, w_mse=W_MSE):
    d = x.astype(jnp.float32) - y.astype(jnp.float32)
    return w_l1 * jnp.mean(jnp.abs(d)) + w_mse * jnp.mean(d * d)


if __name__ == "__main__":
    key = jax.random.PRNGKey(0)
    kx, ky = jax.random.split(key)

    # NCHW inputs, as the PyTorch losses would see them.
    x = jax.random.normal(kx, (2, 4, 16, 16), dtype=jnp.float32)
    y = jax.random.normal(ky, (2, 4, 16, 16), dtype=jnp.float32)
    out = mix_loss(x, y)
    jax.block_until_ready(out)
    ref = mix_loss_ref(x, y)
    assert jnp.allclose(out, ref, rtol=1e-5, atol=1e-6), (out, ref)

    # Ragged total size (exercises the pad path) stays correct too.
    xr = jax.random.normal(kx, (3, 5, 17, 19), dtype=jnp.float32)
    yr = jax.random.normal(ky, (3, 5, 17, 19), dtype=jnp.float32)
    outr = mix_loss(xr, yr)
    jax.block_until_ready(outr)
    refr = mix_loss_ref(xr, yr)
    assert jnp.allclose(outr, refr, rtol=1e-5, atol=1e-6), (outr, refr)

    print("KERNEL_OK")
</pallas_src>

<mosaic_0001>
module attributes {stable_mosaic.version = 11 : i64} {
  func.func @_mix_loss_kernel(%arg0: i32, %arg1: i32, %arg2: memref<16x128xf32, #tpu.memory_space<vmem>>, %arg3: memref<16x128xf32, #tpu.memory_space<vmem>>, %arg4: memref<1x1x128xf32, #tpu.memory_space<vmem>>) attributes {dimension_semantics = [#tpu.dimension_semantics<parallel>, #tpu.dimension_semantics<arbitrary>], iteration_bounds = array<i64: 1, 1>, scalar_prefetch = 0 : i64, scratch_operands = 0 : i64, tpu.core_type = #tpu.core_type<tc>, window_params = [{transform_indices = @transform_0, window_bounds = array<i64: 16, 128>}, {transform_indices = @transform_1, window_bounds = array<i64: 16, 128>}, {transform_indices = @transform_2, window_bounds = array<i64: 1, 1, 128>}]} {
    %c0_i32 = arith.constant 0 : i32
    %0 = arith.cmpi eq, %arg1, %c0_i32 : i32
    %1 = arith.extui %0 : i1 to i32
    %c0_i32_0 = arith.constant 0 : i32
    %2 = arith.cmpi ne, %1, %c0_i32_0 : i32
    scf.if %2 {
      %cst_12 = arith.constant 0.000000e+00 : f32
      %20 = vector.broadcast %cst_12 : f32 to vector<1x1x128xf32>
      %c0_13 = arith.constant 0 : index
      %c0_14 = arith.constant 0 : index
      %c0_15 = arith.constant 0 : index
      %21 = vector.load %arg4[%c0_13, %c0_14, %c0_15] : memref<1x1x128xf32, #tpu.memory_space<vmem>>, vector<1x1x128xf32>
      tpu.vector_store %arg4[%c0_13, %c0_14, %c0_15], %20 {strides = array<i32>} : memref<1x1x128xf32, #tpu.memory_space<vmem>>, vector<1x1x128xf32>,
    } else {
    }
    %c0 = arith.constant 0 : index
    %c0_1 = arith.constant 0 : index
    %3 = vector.load %arg2[%c0, %c0_1] : memref<16x128xf32, #tpu.memory_space<vmem>>, vector<16x128xf32>
    %c0_2 = arith.constant 0 : index
    %c0_3 = arith.constant 0 : index
    %4 = vector.load %arg3[%c0_2, %c0_3] : memref<16x128xf32, #tpu.memory_space<vmem>>, vector<16x128xf32>
    %5 = arith.subf %3, %4 : vector<16x128xf32>
    %6 = math.absf %5 : vector<16x128xf32>
    %cst = arith.constant 6.000000e-01 : f32
    %7 = vector.broadcast %cst : f32 to vector<16x128xf32>
    %8 = arith.mulf %7, %6 : vector<16x128xf32>
    %cst_4 = arith.constant 4.000000e-01 : f32
    %9 = vector.broadcast %cst_4 : f32 to vector<16x128xf32>
    %10 = arith.addf %9, %8 : vector<16x128xf32>
    %11 = arith.mulf %6, %10 : vector<16x128xf32>
    %c0_5 = arith.constant 0 : index
    %c0_6 = arith.constant 0 : index
    %c0_7 = arith.constant 0 : index
    %12 = vector.load %arg4[%c0_5, %c0_6, %c0_7] : memref<1x1x128xf32, #tpu.memory_space<vmem>>, vector<1x1x128xf32>
    %13 = vector.shape_cast %12 : vector<1x1x128xf32> to vector<1x128xf32>
    %cst_8 = arith.constant dense<0.000000e+00> : vector<128xf32>
    %14 = vector.multi_reduction <add>, %11, %cst_8 [0] : vector<16x128xf32> to vector<128xf32>
    %15 = vector.shape_cast %14 : vector<128xf32> to vector<1x128xf32>
    %16 = arith.addf %13, %15 : vector<1x128xf32>
    %c0_9 = arith.constant 0 : index
    %c0_10 = arith.constant 0 : index
    %c0_11 = arith.constant 0 : index
    %17 = vector.load %arg4[%c0_9, %c0_10, %c0_11] : memref<1x1x128xf32, #tpu.memory_space<vmem>>, vector<1x1x128xf32>
    %18 = vector.shape_cast %17 : vector<1x1x128xf32> to vector<1x128xf32>
    %19 = vector.shape_cast %16 : vector<1x128xf32> to vector<1x1x128xf32>
    tpu.vector_store %arg4[%c0_9, %c0_10, %c0_11], %19 {strides = array<i32>} : memref<1x1x128xf32, #tpu.memory_space<vmem>>, vector<1x1x128xf32>,
    return
  }
  func.func @transform_0(%arg0: i32, %arg1: i32) -> (i32, i32) {
    %c1_i32 = arith.constant 1 : i32
    %0 = arith.muli %arg0, %c1_i32 : i32
    %1 = arith.addi %0, %arg1 : i32
    %c0_i32 = arith.constant 0 : i32
    %2 = arith.minsi %1, %c0_i32 : i32
    %c0_i32_0 = arith.constant 0 : i32
    %c0_i32_1 = arith.constant 0 : i32
    return %2, %c0_i32_0 : i32, i32
  }
  func.func @transform_1(%arg0: i32, %arg1: i32) -> (i32, i32) {
    %c1_i32 = arith.constant 1 : i32
    %0 = arith.muli %arg0, %c1_i32 : i32
    %1 = arith.addi %0, %arg1 : i32
    %c0_i32 = arith.constant 0 : i32
    %2 = arith.minsi %1, %c0_i32 : i32
    %c0_i32_0 = arith.constant 0 : i32
    %c0_i32_1 = arith.constant 0 : i32
    return %2, %c0_i32_0 : i32, i32
  }
  func.func @transform_2(%arg0: i32, %arg1: i32) -> (i32, i32, i32) {
    %c0_i32 = arith.constant 0 : i32
    %c0_i32_0 = arith.constant 0 : i32
    %c0_i32_1 = arith.constant 0 : i32
    return %arg0, %c0_i32, %c0_i32_0 : i32, i32, i32
  }
}

</mosaic_0001>

<llo_original>
// kernel: tpu_custom_call.1
$region0: #{tpu_custom_call.1}
  #allocation0 [shape = 'u32[]', space=smem, size = 0x4, offset = 0x4, fixed_abs, tag = 'smem constant byte address 0x4 - core index']
  #allocation1 [shape = 'u32[144,128]{1,0:T(1,128)}', space=vmem, size = 0x12000, scoped, tag = 'internal scratch']
  %s0 = inlined_call_operand.hbm [shape: f32[16,128], index: 0, kind: input, shape index: {}]
  %s1 = inlined_call_operand.hbm [shape: f32[16,128], index: 1, kind: input, shape index: {}]
  %s2 = inlined_call_operand.hbm [shape: f32[1,1,128], index: 2, kind: output, shape index: {}]
  %s3 = sld [smem:[#allocation0]]
  $region30: #{tpu_custom_call.1} parent=0
    _
  %s5 = ssub.s32 1, %s3
  %s6 = scalar_select 0, %s5, %s3
  $region1: #{tpu_custom_call.1} parent=0
    #allocation2 [shape = 'u8[8192]{0}', space=vmem, size = 0x2000, scoped, tag = 'input window, operand 0, single buffered']
    #allocation3 [shape = 's32[1]{0}', space=sflag, size = 0x4, scoped, tag = 'scoped memory for tpu_custom_call.1']
    #allocation4 [shape = 's32[1]{0}', space=sflag, size = 0x4, scoped, tag = 'scoped memory for tpu_custom_call.1']
    #allocation5 [shape = 'u8[8192]{0}', space=vmem, size = 0x2000, scoped, tag = 'input window, operand 1, single buffered']
    #allocation6 [shape = 's32[1]{0}', space=sflag, size = 0x4, scoped, tag = 'scoped memory for tpu_custom_call.1']
    #allocation7 [shape = 'u8[512]{0}', space=vmem, size = 0x400, scoped, tag = 'output window, operand 0, single buffered']
    %7 = vsyncpa [#allocation3], 0
    %8 = vsyncpa [#allocation6], 0
    %9 = vsyncpa [#allocation4], 0
    // Predicated region
    $region2: #{tpu_custom_call.1} parent=1 // pred_check
      _
    $region3: #{tpu_custom_call.1} parent=1 // pred_check_branch
      %11 = sbr.rel (0) target = $region5
    $region4: #{tpu_custom_call.1} parent=1 // pred_region
      %s12 = sadd.s32 0, 0
      %p13 = scmp.lt.s32.totalorder %s12, 0
      %s14 = scalar_select %p13, %s12, 0
      %s15 = smul.u32 2, %s14
      %s17 = ssub.s32 256, 256
      %18 = vsyncadd [#allocation3], %s17
      %s19 = smul.addr %s15, 128
      %s20 = scalar_lea.hbm %s0, %s19
      %s21 = sshll.u32 [#allocation2], 4
      %s22 = int_to_ptr.vmem [resolvable:$true] %s21
      %27 = dma.hbm_to_vmem [thread:$0]  %s20, 256, %s22, [#allocation3], 128, 128, 8
    $region5: #{tpu_custom_call.1} parent=1 // pred_fallthru
      _
    // Predicated region
    $region6: #{tpu_custom_call.1} parent=1 // pred_check
      _
    $region7: #{tpu_custom_call.1} parent=1 // pred_check_branch
      %29 = sbr.rel (0) target = $region9
    $region8: #{tpu_custom_call.1} parent=1 // pred_region
      %s30 = sadd.s32 0, 0
      %p31 = scmp.lt.s32.totalorder %s30, 0
      %s32 = scalar_select %p31, %s30, 0
      %s33 = smul.u32 2, %s32
      %s35 = ssub.s32 256, 256
      %36 = vsyncadd [#allocation6], %s35
      %s37 = smul.addr %s33, 128
      %s38 = scalar_lea.hbm %s1, %s37
      %s39 = sshll.u32 [#allocation5], 4
      %s40 = int_to_ptr.vmem [resolvable:$true] %s39
      %45 = dma.hbm_to_vmem [thread:$0]  %s38, 256, %s40, [#allocation6], 128, 128, 8
    $region9: #{tpu_custom_call.1} parent=1 // pred_fallthru
      _
    // Predicated region
    $region10: #{tpu_custom_call.1} parent=1 // pred_check
      _
    $region11: #{tpu_custom_call.1} parent=1 // pred_check_branch
      %47 = sbr.rel (0) target = $region13
    $region12: #{tpu_custom_call.1} parent=1 // pred_region
      %48 = dma.done [#allocation3], 256
    $region13: #{tpu_custom_call.1} parent=1 // pred_fallthru
      _
    // Predicated region
    $region14: #{tpu_custom_call.1} parent=1 // pred_check
      _
    $region15: #{tpu_custom_call.1} parent=1 // pred_check_branch
      %50 = sbr.rel (0) target = $region17
    $region16: #{tpu_custom_call.1} parent=1 // pred_region
      %51 = dma.done [#allocation6], 256
    $region17: #{tpu_custom_call.1} parent=1 // pred_fallthru
      _
    %s52 = sadd.s32 0, 0
    %p53 = scmp.lt.s32.totalorder %s52, 0
    %s54 = scalar_select %p53, %s52, 0
    %s55 = smul.u32 2, %s54
    %s56 = sadd.s32 0, 0
    %p57 = scmp.lt.s32.totalorder %s56, 0
    %s58 = scalar_select %p57, %s56, 0
    %s59 = smul.u32 2, %s58
    %p60 = scmp.eq.s32.totalorder 0, 0
    // Predicated region
    $region18: #{tpu_custom_call.1} parent=1 // pred_check
      %p61 = pneg %p60
    $region19: #{tpu_custom_call.1} parent=1 // pred_check_branch
      %63 = sbr.rel (%p61) target = $region21
    $region20: #{tpu_custom_call.1} parent=1 // pred_region
      %64 = vst [vmem:[#allocation7] sm:$0x1] 0.0
    $region21: #{tpu_custom_call.1} parent=1 // pred_fallthru
      _
    %v65 = vld [vmem:[#allocation2] sm:$0xff]
    %v66 = vld [vmem:[#allocation2 + $0x8] sm:$0xff]
    %v67 = vld [vmem:[#allocation5] sm:$0xff]
    %v68 = vld [vmem:[#allocation5 + $0x8] sm:$0xff]
    %v69 = vsub.f32 %v65, %v67
    %v70 = vsub.f32 %v66, %v68
    %v71 = vand.u32 2147483647, %v69
    %v72 = vand.u32 2147483647, %v70
    %v73 = vmul.f32 %v71, 0.6
    %v74 = vmul.f32 %v72, 0.6
    %v75 = vadd.f32 %v73, 0.4
    %v76 = vadd.f32 %v74, 0.4
    %v77 = vmul.f32 %v71, %v75
    %v78 = vmul.f32 %v72, %v76
    %v79 = vld [vmem:[#allocation7] sm:$0x1]
    %v80 = vadd.f32 %v77, %v78
    %v81 = vrot.slane %v80, 4
    %v82 = vadd.f32 %v80, %v81
    %v83 = vrot.slane %v82, 2
    %v84 = vadd.f32 %v82, %v83
    %v85 = vrot.slane %v84, 1
    %v86 = vadd.f32 %v84, %v85
    %v87 = vadd.f32 %v79, %v86
    %88 = vst [vmem:[#allocation7] sm:$0x1] %v87
    // Predicated region
    $region22: #{tpu_custom_call.1} parent=1 // pred_check
      _
    $region23: #{tpu_custom_call.1} parent=1 // pred_check_branch
      %90 = sbr.rel (0) target = $region25
    $region24: #{tpu_custom_call.1} parent=1 // pred_region
      %s92 = ssub.s32 16, 16
      %93 = vsyncadd [#allocation4], %s92
      %s95 = sshll.u32 [#allocation7], 4
      %s96 = int_to_ptr.vmem [resolvable:$true] %s95
      %98 = dma.vmem_to_hbm [thread:$0]  %s96, 16, %s2, [#allocation4]
    $region25: #{tpu_custom_call.1} parent=1 // pred_fallthru
      _
    // Predicated region
    $region26: #{tpu_custom_call.1} parent=1 // pred_check
      _
    $region27: #{tpu_custom_call.1} parent=1 // pred_check_branch
      %100 = sbr.rel (0) target = $region29
    $region28: #{tpu_custom_call.1} parent=1 // pred_region
      %101 = dma.done [#allocation4], 16
    $region29: #{tpu_custom_call.1} parent=1 // pred_fallthru
      _
    %102 = vsyncpa [#allocation3], 1
    %103 = vsyncpa [#allocation6], 1
    %104 = vsyncpa [#allocation4], 1

</llo_original>
